<compile_context>
chip_gen: v6e
topology: v6e:2x2x1
jax: 0.10.0
libtpu: 0.0.40
codegen_flags: <defaults>
</compile_context>

<pallas_src>
import functools

import jax
import jax.numpy as jnp
from jax.experimental import pallas as pl
from jax.experimental.pallas import tpu as pltpu

_LANES = 128
_SUB = 32  # row-tile granularity that satisfies f32 (8), bf16 (16), int8 (32)


def _rmsle_partial_kernel(pred_ref, actual_ref, partial_ref, *,
                          steps, tile_rows, n_valid, needs_mask):
    """Accumulate sum((log(p+1) - log(a+1))^2) into this core's (1,8,128) block.

    Grid: (num_cores, steps)
      axis 0 -> sharded across TensorCores (or trivial size-1 axis)
      axis 1 -> sequential reduction over this core's row tiles ("arbitrary")
    The output block index depends only on axis 0, so the (1, 8, 128) output
    block stays resident in VMEM across axis 1 and doubles as the accumulator.
    """
    j = pl.program_id(1)

    @pl.when(j == 0)
    def _():
        partial_ref[...] = jnp.zeros_like(partial_ref)

    # Native-dtype load (bf16/f32/...), upcast on the VPU.
    p = pred_ref[...].astype(jnp.float32)
    a = actual_ref[...].astype(jnp.float32)
    d = jnp.log(p + 1.0) - jnp.log(a + 1.0)
    sq = d * d

    if needs_mask:
        # Grid coverage exceeds the real array: mask by the *intended*
        # (unclamped) global element index so that stale / out-of-range data
        # (and fully out-of-range clamped blocks) contribute exactly zero.
        c = pl.program_id(0)
        base = (c * steps + j) * (tile_rows * _LANES)  # int32; fine below ~2^31 elems
        row = jax.lax.broadcasted_iota(jnp.int32, sq.shape, 0)
        lane = jax.lax.broadcasted_iota(jnp.int32, sq.shape, 1)
        idx = base + row * _LANES + lane
        sq = jnp.where(idx < n_valid, sq, 0.0)

    # Tile-aligned reshape (free) + cross-vreg VPU sum down to one (8,128)
    # block; pure elementwise adds, no per-step cross-lane reduction.
    contrib = jnp.sum(sq.reshape(tile_rows // 8, 8, _LANES), axis=0)
    partial_ref[...] += contrib[None]


def rmsle_loss(pred, actual, *, tile_rows=4096, num_cores=1,
               core_parallel=False, vmem_limit_bytes=None):
    """RMSLE = sqrt(mean((log(pred+1) - log(actual+1))**2)) via Pallas.

    num_cores=1 for single-TC chips (v5e/v6e).  On v7x use num_cores=2 and
    core_parallel=True.  Raise tile_rows (with vmem_limit_bytes) on v6e.
    """
    assert pred.shape == actual.shape
    n = pred.size

    p = pred.reshape(-1)      # native dtype: no astype, no full-array f32 copy
    a = actual.reshape(-1)

    rows = pl.cdiv(n, _LANES)
    rows_padded = max(rows, _SUB)          # tiny inputs: at least one full tile
    padded_n = rows_padded * _LANES
    if padded_n != n:
        # Only the lane-ragged remainder (<=127 elems) / tiny-input case; the
        # large "pad up to grid coverage" of the previous version is gone —
        # that region is handled by the in-kernel mask instead.
        p = jnp.pad(p, (0, padded_n - n))
        a = jnp.pad(a, (0, padded_n - n))
    p2 = p.reshape(rows_padded, _LANES)
    a2 = a.reshape(rows_padded, _LANES)

    # Row-tile selection: multiple of 32 (covers f32/bf16/int8 sublane tiling),
    # never larger than the array, shrunk for small inputs.
    rows_per_core = pl.cdiv(rows_padded, num_cores)
    tr = min(int(tile_rows), rows_per_core)
    tr = max(_SUB, (tr // _SUB) * _SUB)
    tr = min(tr, (rows_padded // _SUB) * _SUB)
    tile_rows = tr

    steps = pl.cdiv(rows_padded, num_cores * tile_rows)
    # Last block whose start row is in-bounds; intended block indices beyond it
    # are clamped in the index_map (their contribution is masked to zero).
    max_block = (rows_padded - 1) // tile_rows
    needs_mask = (num_cores * steps * tile_rows) != rows_padded

    def row_block(c, j):
        return (jnp.minimum(c * steps + j, max_block), 0)

    in_spec = pl.BlockSpec((tile_rows, _LANES), row_block)

    if core_parallel and num_cores > 1:
        dim_sems = (pltpu.CORE_PARALLEL, "arbitrary")   # v7x: use both TCs
    else:
        dim_sems = ("parallel", "arbitrary")

    kernel = functools.partial(
        _rmsle_partial_kernel,
        steps=steps, tile_rows=tile_rows, n_valid=n, needs_mask=needs_mask)

    partials = pl.pallas_call(
        kernel,
        out_shape=jax.ShapeDtypeStruct((num_cores, 8, _LANES), jnp.float32),
        grid_spec=pltpu.PrefetchScalarGridSpec(
            num_scalar_prefetch=0,
            grid=(num_cores, steps),
            in_specs=[in_spec, in_spec],
            out_specs=pl.BlockSpec((1, 8, _LANES), lambda c, j: (c, 0, 0)),
        ),
        compiler_params=pltpu.CompilerParams(
            dimension_semantics=dim_sems,
            vmem_limit_bytes=vmem_limit_bytes,
        ),
    )(p2, a2)

    # Tiny final cross-lane/sublane reduce + mean + sqrt in plain JAX.
    return jnp.sqrt(jnp.sum(partials) / n)


if __name__ == "__main__":
    key = jax.random.PRNGKey(0)
    k1, k2 = jax.random.split(key)

    # Primary test: small NCHW-like shape; RMSLE expects non-negative inputs.
    shape = (2, 4, 16, 16)
    pred = jax.random.uniform(k1, shape, dtype=jnp.float32) * 10.0
    actual = jax.random.uniform(k2, shape, dtype=jnp.float32) * 10.0

    loss = rmsle_loss(pred, actual)
    jax.block_until_ready(loss)
    ref = jnp.sqrt(jnp.mean((jnp.log(pred + 1.0) - jnp.log(actual + 1.0)) ** 2))
    assert jnp.allclose(loss, ref, rtol=1e-5, atol=1e-6), (loss, ref)

    # Secondary test: non-divisible element count exercises the ragged-mask path.
    k3, k4 = jax.random.split(k2)
    shape2 = (3, 5, 17, 19)
    pred2 = jax.random.uniform(k3, shape2, dtype=jnp.float32) * 10.0
    actual2 = jax.random.uniform(k4, shape2, dtype=jnp.float32) * 10.0
    loss2 = rmsle_loss(pred2, actual2)
    jax.block_until_ready(loss2)
    ref2 = jnp.sqrt(
        jnp.mean((jnp.log(pred2 + 1.0) - jnp.log(actual2 + 1.0)) ** 2))
    assert jnp.allclose(loss2, ref2, rtol=1e-5, atol=1e-6), (loss2, ref2)

    # Third test: native bf16 inputs (no wrapper upcast; kernel casts to f32).
    pred_bf = pred2.astype(jnp.bfloat16)
    actual_bf = actual2.astype(jnp.bfloat16)
    loss3 = rmsle_loss(pred_bf, actual_bf)
    jax.block_until_ready(loss3)
    ref3 = jnp.sqrt(jnp.mean(
        (jnp.log(pred_bf.astype(jnp.float32) + 1.0)
         - jnp.log(actual_bf.astype(jnp.float32) + 1.0)) ** 2))
    assert jnp.allclose(loss3, ref3, rtol=1e-5, atol=1e-6), (loss3, ref3)

    # Fourth test: multi-core grid path (clamped out-of-range blocks masked).
    loss4 = rmsle_loss(pred, actual, num_cores=2)
    jax.block_until_ready(loss4)
    assert jnp.allclose(loss4, ref, rtol=1e-5, atol=1e-6), (loss4, ref)

    print("KERNEL_OK")
</pallas_src>

<mosaic_0001>
module attributes {stable_mosaic.version = 11 : i64} {
  func.func @_rmsle_partial_kernel(%arg0: i32, %arg1: i32, %arg2: memref<32x128xf32, #tpu.memory_space<vmem>>, %arg3: memref<32x128xf32, #tpu.memory_space<vmem>>, %arg4: memref<1x8x128xf32, #tpu.memory_space<vmem>>) attributes {dimension_semantics = [#tpu.dimension_semantics<parallel>, #tpu.dimension_semantics<arbitrary>], iteration_bounds = array<i64: 1, 1>, scalar_prefetch = 0 : i64, scratch_operands = 0 : i64, tpu.core_type = #tpu.core_type<tc>, window_params = [{transform_indices = @transform_0, window_bounds = array<i64: 32, 128>}, {transform_indices = @transform_1, window_bounds = array<i64: 32, 128>}, {transform_indices = @transform_2, window_bounds = array<i64: 1, 8, 128>}]} {
    %c0_i32 = arith.constant 0 : i32
    %0 = arith.cmpi eq, %arg1, %c0_i32 : i32
    %1 = arith.extui %0 : i1 to i32
    %c0_i32_0 = arith.constant 0 : i32
    %2 = arith.cmpi ne, %1, %c0_i32_0 : i32
    scf.if %2 {
      %cst_12 = arith.constant 0.000000e+00 : f32
      %19 = vector.broadcast %cst_12 : f32 to vector<1x8x128xf32>
      %c0_13 = arith.constant 0 : index
      %c0_14 = arith.constant 0 : index
      %c0_15 = arith.constant 0 : index
      %20 = vector.load %arg4[%c0_13, %c0_14, %c0_15] : memref<1x8x128xf32, #tpu.memory_space<vmem>>, vector<1x8x128xf32>
      tpu.vector_store %arg4[%c0_13, %c0_14, %c0_15], %19 {strides = array<i32>} : memref<1x8x128xf32, #tpu.memory_space<vmem>>, vector<1x8x128xf32>,
    } else {
    }
    %c0 = arith.constant 0 : index
    %c0_1 = arith.constant 0 : index
    %3 = vector.load %arg2[%c0, %c0_1] : memref<32x128xf32, #tpu.memory_space<vmem>>, vector<32x128xf32>
    %c0_2 = arith.constant 0 : index
    %c0_3 = arith.constant 0 : index
    %4 = vector.load %arg3[%c0_2, %c0_3] : memref<32x128xf32, #tpu.memory_space<vmem>>, vector<32x128xf32>
    %cst = arith.constant 1.000000e+00 : f32
    %5 = vector.broadcast %cst : f32 to vector<32x128xf32>
    %6 = arith.addf %3, %5 : vector<32x128xf32>
    %7 = math.log %6 : vector<32x128xf32>
    %cst_4 = arith.constant 1.000000e+00 : f32
    %8 = vector.broadcast %cst_4 : f32 to vector<32x128xf32>
    %9 = arith.addf %4, %8 : vector<32x128xf32>
    %10 = math.log %9 : vector<32x128xf32>
    %11 = arith.subf %7, %10 : vector<32x128xf32>
    %12 = arith.mulf %11, %11 : vector<32x128xf32>
    %13 = vector.shape_cast %12 : vector<32x128xf32> to vector<4x8x128xf32>
    %cst_5 = arith.constant dense<0.000000e+00> : vector<8x128xf32>
    %14 = vector.multi_reduction <add>, %13, %cst_5 [0] : vector<4x8x128xf32> to vector<8x128xf32>
    %c0_6 = arith.constant 0 : index
    %c0_7 = arith.constant 0 : index
    %c0_8 = arith.constant 0 : index
    %15 = vector.load %arg4[%c0_6, %c0_7, %c0_8] : memref<1x8x128xf32, #tpu.memory_space<vmem>>, vector<1x8x128xf32>
    %16 = vector.shape_cast %14 : vector<8x128xf32> to vector<1x8x128xf32>
    %17 = arith.addf %15, %16 : vector<1x8x128xf32>
    %c0_9 = arith.constant 0 : index
    %c0_10 = arith.constant 0 : index
    %c0_11 = arith.constant 0 : index
    %18 = vector.load %arg4[%c0_9, %c0_10, %c0_11] : memref<1x8x128xf32, #tpu.memory_space<vmem>>, vector<1x8x128xf32>
    tpu.vector_store %arg4[%c0_9, %c0_10, %c0_11], %17 {strides = array<i32>} : memref<1x8x128xf32, #tpu.memory_space<vmem>>, vector<1x8x128xf32>,
    return
  }
  func.func @transform_0(%arg0: i32, %arg1: i32) -> (i32, i32) {
    %c1_i32 = arith.constant 1 : i32
    %0 = arith.muli %arg0, %c1_i32 : i32
    %1 = arith.addi %0, %arg1 : i32
    %c0_i32 = arith.constant 0 : i32
    %2 = arith.minsi %1, %c0_i32 : i32
    %c0_i32_0 = arith.constant 0 : i32
    %c0_i32_1 = arith.constant 0 : i32
    return %2, %c0_i32_0 : i32, i32
  }
  func.func @transform_1(%arg0: i32, %arg1: i32) -> (i32, i32) {
    %c1_i32 = arith.constant 1 : i32
    %0 = arith.muli %arg0, %c1_i32 : i32
    %1 = arith.addi %0, %arg1 : i32
    %c0_i32 = arith.constant 0 : i32
    %2 = arith.minsi %1, %c0_i32 : i32
    %c0_i32_0 = arith.constant 0 : i32
    %c0_i32_1 = arith.constant 0 : i32
    return %2, %c0_i32_0 : i32, i32
  }
  func.func @transform_2(%arg0: i32, %arg1: i32) -> (i32, i32, i32) {
    %c0_i32 = arith.constant 0 : i32
    %c0_i32_0 = arith.constant 0 : i32
    %c0_i32_1 = arith.constant 0 : i32
    return %arg0, %c0_i32, %c0_i32_0 : i32, i32, i32
  }
}

</mosaic_0001>

<llo_original>
// kernel: tpu_custom_call.1
$region0: #{tpu_custom_call.1}
  #allocation0 [shape = 'u32[]', space=smem, size = 0x4, offset = 0x4, fixed_abs, tag = 'smem constant byte address 0x4 - core index']
  #allocation1 [shape = 'u32[144,128]{1,0:T(1,128)}', space=vmem, size = 0x12000, scoped, tag = 'internal scratch']
  %s0 = inlined_call_operand.hbm [shape: f32[32,128], index: 0, kind: input, shape index: {}]
  %s1 = inlined_call_operand.hbm [shape: f32[32,128], index: 1, kind: input, shape index: {}]
  %s2 = inlined_call_operand.hbm [shape: f32[1,8,128], index: 2, kind: output, shape index: {}]
  %s3 = sld [smem:[#allocation0]]
  $region30: #{tpu_custom_call.1} parent=0
    _
  %s5 = ssub.s32 1, %s3
  %s6 = scalar_select 0, %s5, %s3
  $region1: #{tpu_custom_call.1} parent=0
    #allocation2 [shape = 'u8[16384]{0}', space=vmem, size = 0x4000, scoped, tag = 'input window, operand 0, single buffered']
    #allocation3 [shape = 's32[1]{0}', space=sflag, size = 0x4, scoped, tag = 'scoped memory for tpu_custom_call.1']
    #allocation4 [shape = 's32[1]{0}', space=sflag, size = 0x4, scoped, tag = 'scoped memory for tpu_custom_call.1']
    #allocation5 [shape = 'u8[16384]{0}', space=vmem, size = 0x4000, scoped, tag = 'input window, operand 1, single buffered']
    #allocation6 [shape = 's32[1]{0}', space=sflag, size = 0x4, scoped, tag = 'scoped memory for tpu_custom_call.1']
    #allocation7 [shape = 'u8[4096]{0}', space=vmem, size = 0x1000, scoped, tag = 'output window, operand 0, single buffered']
    %7 = vsyncpa [#allocation3], 0
    %8 = vsyncpa [#allocation6], 0
    %9 = vsyncpa [#allocation4], 0
    // Predicated region
    $region2: #{tpu_custom_call.1} parent=1 // pred_check
      _
    $region3: #{tpu_custom_call.1} parent=1 // pred_check_branch
      %11 = sbr.rel (0) target = $region5
    $region4: #{tpu_custom_call.1} parent=1 // pred_region
      %s12 = sadd.s32 0, 0
      %p13 = scmp.lt.s32.totalorder %s12, 0
      %s14 = scalar_select %p13, %s12, 0
      %s15 = smul.u32 4, %s14
      %s17 = ssub.s32 512, 512
      %18 = vsyncadd [#allocation3], %s17
      %s19 = smul.addr %s15, 128
      %s20 = scalar_lea.hbm %s0, %s19
      %s21 = sshll.u32 [#allocation2], 4
      %s22 = int_to_ptr.vmem [resolvable:$true] %s21
      %27 = dma.hbm_to_vmem [thread:$0]  %s20, 512, %s22, [#allocation3], 128, 128, 8
    $region5: #{tpu_custom_call.1} parent=1 // pred_fallthru
      _
    // Predicated region
    $region6: #{tpu_custom_call.1} parent=1 // pred_check
      _
    $region7: #{tpu_custom_call.1} parent=1 // pred_check_branch
      %29 = sbr.rel (0) target = $region9
    $region8: #{tpu_custom_call.1} parent=1 // pred_region
      %s30 = sadd.s32 0, 0
      %p31 = scmp.lt.s32.totalorder %s30, 0
      %s32 = scalar_select %p31, %s30, 0
      %s33 = smul.u32 4, %s32
      %s35 = ssub.s32 512, 512
      %36 = vsyncadd [#allocation6], %s35
      %s37 = smul.addr %s33, 128
      %s38 = scalar_lea.hbm %s1, %s37
      %s39 = sshll.u32 [#allocation5], 4
      %s40 = int_to_ptr.vmem [resolvable:$true] %s39
      %45 = dma.hbm_to_vmem [thread:$0]  %s38, 512, %s40, [#allocation6], 128, 128, 8
    $region9: #{tpu_custom_call.1} parent=1 // pred_fallthru
      _
    // Predicated region
    $region10: #{tpu_custom_call.1} parent=1 // pred_check
      _
    $region11: #{tpu_custom_call.1} parent=1 // pred_check_branch
      %47 = sbr.rel (0) target = $region13
    $region12: #{tpu_custom_call.1} parent=1 // pred_region
      %48 = dma.done [#allocation3], 512
    $region13: #{tpu_custom_call.1} parent=1 // pred_fallthru
      _
    // Predicated region
    $region14: #{tpu_custom_call.1} parent=1 // pred_check
      _
    $region15: #{tpu_custom_call.1} parent=1 // pred_check_branch
      %50 = sbr.rel (0) target = $region17
    $region16: #{tpu_custom_call.1} parent=1 // pred_region
      %51 = dma.done [#allocation6], 512
    $region17: #{tpu_custom_call.1} parent=1 // pred_fallthru
      _
    %s52 = sadd.s32 0, 0
    %p53 = scmp.lt.s32.totalorder %s52, 0
    %s54 = scalar_select %p53, %s52, 0
    %s55 = smul.u32 4, %s54
    %s56 = sadd.s32 0, 0
    %p57 = scmp.lt.s32.totalorder %s56, 0
    %s58 = scalar_select %p57, %s56, 0
    %s59 = smul.u32 4, %s58
    %p60 = scmp.eq.s32.totalorder 0, 0
    // Predicated region
    $region18: #{tpu_custom_call.1} parent=1 // pred_check
      %p61 = pneg %p60
    $region19: #{tpu_custom_call.1} parent=1 // pred_check_branch
      %63 = sbr.rel (%p61) target = $region21
    $region20: #{tpu_custom_call.1} parent=1 // pred_region
      %64 = vst [vmem:[#allocation7] sm:$0xff] 0.0
    $region21: #{tpu_custom_call.1} parent=1 // pred_fallthru
      _
    %v65 = vld [vmem:[#allocation2] sm:$0xff]
    %v66 = vld [vmem:[#allocation2 + $0x8] sm:$0xff]
    %v67 = vld [vmem:[#allocation2 + $0x10] sm:$0xff]
    %v68 = vld [vmem:[#allocation2 + $0x18] sm:$0xff]
    %v69 = vld [vmem:[#allocation5] sm:$0xff]
    %v70 = vld [vmem:[#allocation5 + $0x8] sm:$0xff]
    %v71 = vld [vmem:[#allocation5 + $0x10] sm:$0xff]
    %v72 = vld [vmem:[#allocation5 + $0x18] sm:$0xff]
    %v73 = vadd.f32 %v65, 1.0
    %v74 = vadd.f32 %v66, 1.0
    %v75 = vadd.f32 %v67, 1.0
    %v76 = vadd.f32 %v68, 1.0
    %v77 = vlog2.pop %v73
    %v78 = vmul.f32 %v77, 0.6931472
    %v79 = vlog2.pop %v74
    %v80 = vmul.f32 %v79, 0.6931472
    %v81 = vlog2.pop %v75
    %v82 = vmul.f32 %v81, 0.6931472
    %v83 = vlog2.pop %v76
    %v84 = vmul.f32 %v83, 0.6931472
    %v85 = vadd.f32 %v69, 1.0
    %v86 = vadd.f32 %v70, 1.0
    %v87 = vadd.f32 %v71, 1.0
    %v88 = vadd.f32 %v72, 1.0
    %v89 = vlog2.pop %v85
    %v90 = vmul.f32 %v89, 0.6931472
    %v91 = vlog2.pop %v86
    %v92 = vmul.f32 %v91, 0.6931472
    %v93 = vlog2.pop %v87
    %v94 = vmul.f32 %v93, 0.6931472
    %v95 = vlog2.pop %v88
    %v96 = vmul.f32 %v95, 0.6931472
    %v97 = vsub.f32 %v78, %v90
    %v98 = vsub.f32 %v80, %v92
    %v99 = vsub.f32 %v82, %v94
    %v100 = vsub.f32 %v84, %v96
    %v101 = vmul.f32 %v97, %v97
    %v102 = vmul.f32 %v98, %v98
    %v103 = vmul.f32 %v99, %v99
    %v104 = vmul.f32 %v100, %v100
    %v105 = vadd.f32 %v101, %v102
    %v106 = vadd.f32 %v105, %v103
    %v107 = vadd.f32 %v106, %v104
    %v108 = vld [vmem:[#allocation7] sm:$0xff]
    %v109 = vadd.f32 %v108, %v107
    %110 = vst [vmem:[#allocation7] sm:$0xff] %v109
    // Predicated region
    $region22: #{tpu_custom_call.1} parent=1 // pred_check
      _
    $region23: #{tpu_custom_call.1} parent=1 // pred_check_branch
      %112 = sbr.rel (0) target = $region25
    $region24: #{tpu_custom_call.1} parent=1 // pred_region
      %s114 = ssub.s32 128, 128
      %115 = vsyncadd [#allocation4], %s114
      %s117 = sshll.u32 [#allocation7], 4
      %s118 = int_to_ptr.vmem [resolvable:$true] %s117
      %120 = dma.vmem_to_hbm [thread:$0]  %s118, 128, %s2, [#allocation4]
    $region25: #{tpu_custom_call.1} parent=1 // pred_fallthru
      _
    // Predicated region
    $region26: #{tpu_custom_call.1} parent=1 // pred_check
      _
    $region27: #{tpu_custom_call.1} parent=1 // pred_check_branch
      %122 = sbr.rel (0) target = $region29
    $region28: #{tpu_custom_call.1} parent=1 // pred_region
      %123 = dma.done [#allocation4], 128
    $region29: #{tpu_custom_call.1} parent=1 // pred_fallthru
      _
    %124 = vsyncpa [#allocation3], 1
    %125 = vsyncpa [#allocation6], 1
    %126 = vsyncpa [#allocation4], 1

</llo_original>
